<compile_context>
chip_gen: v7x
topology: tpu7x:2x2x1
jax: 0.10.0
libtpu: 0.0.40
codegen_flags: <defaults>
</compile_context>

<pallas_src>
import functools

import jax
import jax.numpy as jnp
from jax.experimental import pallas as pl
from jax.experimental.pallas import tpu as pltpu


def _poisson_loss_kernel(pred_ref, tgt_ref, acc_ref, *, bias, tm, acc_rows,
                         m_rows, steps_per_shard):
    """One grid step: (tm, n_lanes) row tile -> partial per-lane column sums."""
    c = pl.program_id(0)   # row shard (parallel -> TensorCores on multi-core chips)
    i = pl.program_id(1)   # row-tile step within the shard (reduction axis)

    @pl.when(i == 0)
    def _():
        acc_ref[...] = jnp.zeros_like(acc_ref)

    x = pred_ref[...].astype(jnp.float32)
    t = tgt_ref[...].astype(jnp.float32)
    loss = x - t * jnp.log(x + bias)                      # elementwise hot path

    # Mask rows past the true end: handles the ragged last tile and any
    # shard-overhang (clamped) blocks without padding the inputs in HBM.
    row_start = (c * steps_per_shard + i) * tm
    rows = row_start + jax.lax.broadcasted_iota(jnp.int32, (tm, 1), 0)
    loss = jnp.where(rows < m_rows, loss, 0.0)

    if acc_rows > 1:
        # Keep 8 sublanes alive: per-step reduction is pure VPU adds; the
        # final 8 -> 1 cross-sublane reduction happens once, in the epilogue.
        acc_ref[...] += loss.reshape(tm // acc_rows, acc_rows,
                                     loss.shape[-1]).sum(axis=0)
    else:
        acc_ref[...] += loss.sum(axis=0, keepdims=True)


def _pick_tm(m_rows, n_lanes, bytes_per_elem_pair, *, tm_max,
             vmem_budget_bytes=12 * 1024 * 1024):
    """Largest row-tile height whose double-buffered windows fit the budget."""
    lanes_padded = ((n_lanes + 127) // 128) * 128
    per_row = 2 * lanes_padded * bytes_per_elem_pair   # 2 pipeline buffers
    tm = min(tm_max, max(8, vmem_budget_bytes // per_row))
    tm = max(8, (tm // 8) * 8)
    if m_rows <= tm:
        return m_rows   # single block covering all rows (legal block height)
    return tm


def poisson_loss_3d(output, target, *, bias=1e-16, per_neuron=False,
                    tm_max=1024, num_row_shards=2):
    """JAX/Pallas equivalent of PoissonLoss3d.forward(output, target)."""
    B, T_out, N = output.shape
    lag = target.shape[1] - T_out

    tgt = target[:, lag:, :]                 # (B, T_out, N)
    M = B * T_out
    pred2 = output.reshape(M, N)             # contiguous -> free reshape
    tgt2 = tgt.reshape(M, N)

    # Lane packing for small neuron counts: keeps all 128 lanes busy and
    # shrinks the VMEM tile footprint (free, contiguous reshape).
    n_lanes, m_rows, pack = N, M, 1
    if N < 128 and 128 % N == 0 and M % (128 // N) == 0:
        pack = 128 // N
        n_lanes = N * pack
        m_rows = M // pack
        pred2 = pred2.reshape(m_rows, n_lanes)
        tgt2 = tgt2.reshape(m_rows, n_lanes)

    bytes_pair = pred2.dtype.itemsize + tgt2.dtype.itemsize
    tm = _pick_tm(m_rows, n_lanes, bytes_pair, tm_max=tm_max)
    nblocks = pl.cdiv(m_rows, tm)
    shards = max(1, min(num_row_shards, nblocks))
    spc = pl.cdiv(nblocks, shards)           # row-tile steps per shard
    acc_rows = 8 if tm % 8 == 0 else 1

    kernel = functools.partial(
        _poisson_loss_kernel, bias=bias, tm=tm, acc_rows=acc_rows,
        m_rows=m_rows, steps_per_shard=spc)

    def in_map(c, i):
        # Clamp overhang blocks (when nblocks % shards != 0); the kernel masks
        # their contribution to exactly zero via the row mask.
        return (jnp.minimum(c * spc + i, nblocks - 1), 0)

    partial_sums = pl.pallas_call(
        kernel,
        out_shape=jax.ShapeDtypeStruct((shards * acc_rows, n_lanes), jnp.float32),
        grid=(shards, spc),
        in_specs=[
            pl.BlockSpec((tm, n_lanes), in_map),
            pl.BlockSpec((tm, n_lanes), in_map),
        ],
        out_specs=pl.BlockSpec((acc_rows, n_lanes), lambda c, i: (c, 0)),
        compiler_params=pltpu.CompilerParams(
            dimension_semantics=("parallel", "arbitrary"),
            vmem_limit_bytes=32 * 1024 * 1024,
        ),
    )(pred2, tgt2)

    colsum = partial_sums.sum(axis=0)        # (n_lanes,)
    if pack > 1:
        colsum = colsum.reshape(pack, N).sum(axis=0)   # (N,)

    if per_neuron:
        # loss.view(-1, N).mean(dim=0)
        return (colsum / M).astype(output.dtype)
    # loss.mean()
    return (jnp.sum(colsum) / (M * N)).astype(output.dtype)


def _reference(output, target, bias=1e-16, per_neuron=False):
    lag = target.shape[1] - output.shape[1]
    loss = output - target[:, lag:, :] * jnp.log(output + bias)
    if not per_neuron:
        return loss.mean()
    return loss.reshape(-1, loss.shape[-1]).mean(axis=0)


def _check(output, target, **kw):
    got_s = poisson_loss_3d(output, target, per_neuron=False, **kw)
    got_n = poisson_loss_3d(output, target, per_neuron=True, **kw)
    jax.block_until_ready(got_s)
    jax.block_until_ready(got_n)
    ref_s = _reference(output, target, per_neuron=False)
    ref_n = _reference(output, target, per_neuron=True)
    assert jnp.allclose(got_s, ref_s, rtol=1e-5, atol=1e-5), (got_s, ref_s)
    assert jnp.allclose(got_n, ref_n, rtol=1e-5, atol=1e-5)


if __name__ == "__main__":
    key = jax.random.PRNGKey(0)

    # 1) Small case matching the original module usage (lag = 2, N = 16).
    k1, k2, key = (*jax.random.split(key, 2), key)
    B, T_out, T_tgt, N = 2, 6, 8, 16
    out1 = jax.random.uniform(k1, (B, T_out, N), dtype=jnp.float32) + 0.1
    tgt1 = jax.random.uniform(k2, (B, T_tgt, N), dtype=jnp.float32) * 3.0
    _check(out1, tgt1)

    # 2) Lane-packing path (N = 16 < 128, rows divisible by 128//N = 8).
    k3, k4, key = (*jax.random.split(key, 2), key)
    out2 = jax.random.uniform(k3, (2, 16, 16), dtype=jnp.float32) + 0.1
    tgt2 = jax.random.uniform(k4, (2, 20, 16), dtype=jnp.float32) * 3.0
    _check(out2, tgt2)

    # 3) Multi-tile path: ragged last tile + 2 row shards (tm_max forces tiling).
    k5, k6 = jax.random.split(key)
    out3 = jax.random.uniform(k5, (3, 40, 33), dtype=jnp.float32) + 0.1
    tgt3 = jax.random.uniform(k6, (3, 45, 33), dtype=jnp.float32) * 3.0
    _check(out3, tgt3, tm_max=32)

    print("KERNEL_OK")
</pallas_src>

<mosaic_0001>
module attributes {stable_mosaic.version = 11 : i64} {
  func.func @_poisson_loss_kernel(%arg0: i32, %arg1: i32, %arg2: memref<12x16xf32, #tpu.memory_space<vmem>>, %arg3: memref<12x16xf32, #tpu.memory_space<vmem>>, %arg4: memref<1x16xf32, #tpu.memory_space<vmem>>) attributes {dimension_semantics = [#tpu.dimension_semantics<parallel>, #tpu.dimension_semantics<arbitrary>], iteration_bounds = array<i64: 1, 1>, scalar_prefetch = 0 : i64, scratch_operands = 0 : i64, tpu.core_type = #tpu.core_type<tc>, window_params = [{transform_indices = @transform_0, window_bounds = array<i64: 12, 16>}, {transform_indices = @transform_1, window_bounds = array<i64: 12, 16>}, {transform_indices = @transform_2, window_bounds = array<i64: 1, 16>}]} {
    %c0_i32 = arith.constant 0 : i32
    %0 = arith.cmpi eq, %arg1, %c0_i32 : i32
    %1 = arith.extui %0 : i1 to i32
    %c0_i32_0 = arith.constant 0 : i32
    %2 = arith.cmpi ne, %1, %c0_i32_0 : i32
    scf.if %2 {
      %cst_11 = arith.constant 0.000000e+00 : f32
      %27 = vector.broadcast %cst_11 : f32 to vector<1x16xf32>
      %c0_12 = arith.constant 0 : index
      %c0_13 = arith.constant 0 : index
      %28 = vector.load %arg4[%c0_12, %c0_13] : memref<1x16xf32, #tpu.memory_space<vmem>>, vector<1x16xf32>
      tpu.vector_store %arg4[%c0_12, %c0_13], %27 {strides = array<i32>} : memref<1x16xf32, #tpu.memory_space<vmem>>, vector<1x16xf32>,
    } else {
    }
    %c0 = arith.constant 0 : index
    %c0_1 = arith.constant 0 : index
    %3 = vector.load %arg2[%c0, %c0_1] : memref<12x16xf32, #tpu.memory_space<vmem>>, vector<12x16xf32>
    %c0_2 = arith.constant 0 : index
    %c0_3 = arith.constant 0 : index
    %4 = vector.load %arg3[%c0_2, %c0_3] : memref<12x16xf32, #tpu.memory_space<vmem>>, vector<12x16xf32>
    %cst = arith.constant 1.000000e-16 : f32
    %5 = vector.broadcast %cst : f32 to vector<12x16xf32>
    %6 = arith.addf %3, %5 : vector<12x16xf32>
    %7 = math.log %6 : vector<12x16xf32>
    %8 = arith.mulf %4, %7 : vector<12x16xf32>
    %9 = arith.subf %3, %8 : vector<12x16xf32>
    %c1_i32 = arith.constant 1 : i32
    %10 = arith.muli %arg0, %c1_i32 : i32
    %11 = arith.addi %10, %arg1 : i32
    %c12_i32 = arith.constant 12 : i32
    %12 = arith.muli %11, %c12_i32 : i32
    %13 = tpu.iota {dimensions = array<i32: 0>} : vector<12x1xi32>
    %14 = vector.broadcast %12 : i32 to vector<12x1xi32>
    %15 = arith.addi %14, %13 : vector<12x1xi32>
    %c12_i32_4 = arith.constant 12 : i32
    %16 = vector.broadcast %c12_i32_4 : i32 to vector<12x1xi32>
    %17 = arith.cmpi slt, %15, %16 : vector<12x1xi32>
    %cst_5 = arith.constant 0.000000e+00 : f32
    %18 = vector.shape_cast %17 : vector<12x1xi1> to vector<12x1xi1>
    %19 = vector.broadcast %18 : vector<12x1xi1> to vector<12x16xi1>
    %20 = vector.broadcast %cst_5 : f32 to vector<12x16xf32>
    %21 = arith.select %19, %9, %20 : vector<12x16xi1>, vector<12x16xf32>
    %c0_6 = arith.constant 0 : index
    %c0_7 = arith.constant 0 : index
    %22 = vector.load %arg4[%c0_6, %c0_7] : memref<1x16xf32, #tpu.memory_space<vmem>>, vector<1x16xf32>
    %cst_8 = arith.constant dense<0.000000e+00> : vector<16xf32>
    %23 = vector.multi_reduction <add>, %21, %cst_8 [0] : vector<12x16xf32> to vector<16xf32>
    %24 = vector.shape_cast %23 : vector<16xf32> to vector<1x16xf32>
    %25 = arith.addf %22, %24 : vector<1x16xf32>
    %c0_9 = arith.constant 0 : index
    %c0_10 = arith.constant 0 : index
    %26 = vector.load %arg4[%c0_9, %c0_10] : memref<1x16xf32, #tpu.memory_space<vmem>>, vector<1x16xf32>
    tpu.vector_store %arg4[%c0_9, %c0_10], %25 {strides = array<i32>} : memref<1x16xf32, #tpu.memory_space<vmem>>, vector<1x16xf32>,
    return
  }
  func.func @transform_0(%arg0: i32, %arg1: i32) -> (i32, i32) {
    %c1_i32 = arith.constant 1 : i32
    %0 = arith.muli %arg0, %c1_i32 : i32
    %1 = arith.addi %0, %arg1 : i32
    %c0_i32 = arith.constant 0 : i32
    %2 = arith.minsi %1, %c0_i32 : i32
    %c0_i32_0 = arith.constant 0 : i32
    %c0_i32_1 = arith.constant 0 : i32
    return %2, %c0_i32_0 : i32, i32
  }
  func.func @transform_1(%arg0: i32, %arg1: i32) -> (i32, i32) {
    %c1_i32 = arith.constant 1 : i32
    %0 = arith.muli %arg0, %c1_i32 : i32
    %1 = arith.addi %0, %arg1 : i32
    %c0_i32 = arith.constant 0 : i32
    %2 = arith.minsi %1, %c0_i32 : i32
    %c0_i32_0 = arith.constant 0 : i32
    %c0_i32_1 = arith.constant 0 : i32
    return %2, %c0_i32_0 : i32, i32
  }
  func.func @transform_2(%arg0: i32, %arg1: i32) -> (i32, i32) {
    %c0_i32 = arith.constant 0 : i32
    %c0_i32_0 = arith.constant 0 : i32
    return %arg0, %c0_i32 : i32, i32
  }
}

</mosaic_0001>

<llo_original>
// kernel: tpu_custom_call.1
$region0: #{tpu_custom_call.1}
  #allocation0 [shape = 'u32[]', space=smem, size = 0x4, offset = 0x4, fixed_abs, tag = 'smem constant byte address 0x4 - core index']
  #allocation1 [shape = 'u32[144,128]{1,0:T(1,128)}', space=vmem, size = 0x12000, scoped, tag = 'internal scratch']
  %s0 = inlined_call_operand.hbm [shape: f32[12,16], index: 0, kind: input, shape index: {}]
  %s1 = inlined_call_operand.hbm [shape: f32[12,16], index: 1, kind: input, shape index: {}]
  %s2 = inlined_call_operand.hbm [shape: f32[1,16], index: 2, kind: output, shape index: {}]
  %s3 = sld [smem:[#allocation0]]
  $region30: #{tpu_custom_call.1} parent=0
    _
  %s5 = ssub.s32 1, %s3
  %s6 = scalar_select 0, %s5, %s3
  $region1: #{tpu_custom_call.1} parent=0
    #allocation2 [shape = 'u8[8192]{0}', space=vmem, size = 0x2000, scoped, tag = 'input window, operand 0, single buffered']
    #allocation3 [shape = 's32[1]{0}', space=sflag, size = 0x4, scoped, tag = 'scoped memory for tpu_custom_call.1']
    #allocation4 [shape = 's32[1]{0}', space=sflag, size = 0x4, scoped, tag = 'scoped memory for tpu_custom_call.1']
    #allocation5 [shape = 'u8[8192]{0}', space=vmem, size = 0x2000, scoped, tag = 'input window, operand 1, single buffered']
    #allocation6 [shape = 's32[1]{0}', space=sflag, size = 0x4, scoped, tag = 'scoped memory for tpu_custom_call.1']
    #allocation7 [shape = 'u8[512]{0}', space=vmem, size = 0x400, scoped, tag = 'output window, operand 0, single buffered']
    %7 = vsyncpa [#allocation3], 0
    %8 = vsyncpa [#allocation6], 0
    %9 = vsyncpa [#allocation4], 0
    // Predicated region
    $region2: #{tpu_custom_call.1} parent=1 // pred_check
      _
    $region3: #{tpu_custom_call.1} parent=1 // pred_check_branch
      %11 = sbr.rel (0) target = $region5
    $region4: #{tpu_custom_call.1} parent=1 // pred_region
      %s12 = sadd.s32 0, 0
      %p13 = scmp.lt.s32.totalorder %s12, 0
      %s14 = scalar_select %p13, %s12, 0
      %s15 = smul.u32 2, %s14
      %s17 = ssub.s32 256, 256
      %18 = vsyncadd [#allocation3], %s17
      %s19 = smul.addr %s15, 128
      %s20 = scalar_lea.hbm %s0, %s19
      %s21 = sshll.u32 [#allocation2], 4
      %s22 = int_to_ptr.vmem [resolvable:$true] %s21
      %27 = dma.hbm_to_vmem [thread:$0]  %s20, 256, %s22, [#allocation3], 128, 128, 8
    $region5: #{tpu_custom_call.1} parent=1 // pred_fallthru
      _
    // Predicated region
    $region6: #{tpu_custom_call.1} parent=1 // pred_check
      _
    $region7: #{tpu_custom_call.1} parent=1 // pred_check_branch
      %29 = sbr.rel (0) target = $region9
    $region8: #{tpu_custom_call.1} parent=1 // pred_region
      %s30 = sadd.s32 0, 0
      %p31 = scmp.lt.s32.totalorder %s30, 0
      %s32 = scalar_select %p31, %s30, 0
      %s33 = smul.u32 2, %s32
      %s35 = ssub.s32 256, 256
      %36 = vsyncadd [#allocation6], %s35
      %s37 = smul.addr %s33, 128
      %s38 = scalar_lea.hbm %s1, %s37
      %s39 = sshll.u32 [#allocation5], 4
      %s40 = int_to_ptr.vmem [resolvable:$true] %s39
      %45 = dma.hbm_to_vmem [thread:$0]  %s38, 256, %s40, [#allocation6], 128, 128, 8
    $region9: #{tpu_custom_call.1} parent=1 // pred_fallthru
      _
    // Predicated region
    $region10: #{tpu_custom_call.1} parent=1 // pred_check
      _
    $region11: #{tpu_custom_call.1} parent=1 // pred_check_branch
      %47 = sbr.rel (0) target = $region13
    $region12: #{tpu_custom_call.1} parent=1 // pred_region
      %48 = dma.done [#allocation3], 256
    $region13: #{tpu_custom_call.1} parent=1 // pred_fallthru
      _
    // Predicated region
    $region14: #{tpu_custom_call.1} parent=1 // pred_check
      _
    $region15: #{tpu_custom_call.1} parent=1 // pred_check_branch
      %50 = sbr.rel (0) target = $region17
    $region16: #{tpu_custom_call.1} parent=1 // pred_region
      %51 = dma.done [#allocation6], 256
    $region17: #{tpu_custom_call.1} parent=1 // pred_fallthru
      _
    %s52 = sadd.s32 0, 0
    %p53 = scmp.lt.s32.totalorder %s52, 0
    %s54 = scalar_select %p53, %s52, 0
    %s55 = smul.u32 2, %s54
    %s56 = sadd.s32 0, 0
    %p57 = scmp.lt.s32.totalorder %s56, 0
    %s58 = scalar_select %p57, %s56, 0
    %s59 = smul.u32 2, %s58
    %p60 = scmp.eq.s32.totalorder 0, 0
    // Predicated region
    $region18: #{tpu_custom_call.1} parent=1 // pred_check
      %p61 = pneg %p60
    $region19: #{tpu_custom_call.1} parent=1 // pred_check_branch
      %63 = sbr.rel (%p61) target = $region21
    $region20: #{tpu_custom_call.1} parent=1 // pred_region
      %vm64 = vcmask 122880
      %65 = vst.msk [vmem:[#allocation7] sm:$0x1] %vm64, 0.0
    $region21: #{tpu_custom_call.1} parent=1 // pred_fallthru
      _
    %v66 = vld [vmem:[#allocation2] sm:$0xff]
    %v67 = vld [vmem:[#allocation2 + $0x8] sm:$0xf]
    %v68 = vld [vmem:[#allocation5] sm:$0xff]
    %v69 = vld [vmem:[#allocation5 + $0x8] sm:$0xf]
    %v70 = vadd.f32 %v66, 1e-16
    %v71 = vadd.f32 %v67, 1e-16
    %v72 = vlog2.pop %v70
    %v73 = vmul.f32 %v72, 0.6931472
    %v74 = vlog2.pop %v71
    %v75 = vmul.f32 %v74, 0.6931472
    %v76 = vmul.f32 %v68, %v73
    %v77 = vmul.f32 %v69, %v75
    %v78 = vsub.f32 %v66, %v76
    %v79 = vsub.f32 %v67, %v77
    %s80 = sadd.s32 0, 0
    %s81 = smul.u32 %s80, 12
    %v82 = vlaneseq
    %v83 = vshrl.u32 %v82, 7
    %v84 = vadd.s32 %v83, 8
    %v85 = vstv %s81
    %v86 = vadd.s32 %v85, %v83
    %v87 = vadd.s32 %v85, %v84
    %vm88 = vcmp.lt.s32.totalorder %v86, 12
    %vm89 = vcmp.lt.s32.totalorder %v87, 12
    %v90 = vsel %vm88, 1, 0
    %v91 = vsel %vm89, 1, 0
    %vm92 = vcmp.eq.s32.totalorder %v90, 1
    %vm93 = vcmp.eq.s32.totalorder %v91, 1
    %v94 = vsel %vm92, %v78, 0.0
    %v95 = vsel %vm93, %v79, 0.0
    %v96 = vld [vmem:[#allocation7] sm:$0x1]
    %vm97 = vcmask 130048
    %v98 = vsel %vm97, %v94, 0.0
    %vm99 = vcmask 125952
    %v100 = vsel %vm99, %v95, 0.0
    %v101 = vadd.f32 %v98, %v100
    %v102 = vrot.slane %v101, 4
    %v103 = vadd.f32 %v101, %v102
    %v104 = vrot.slane %v103, 2
    %v105 = vadd.f32 %v103, %v104
    %v106 = vrot.slane %v105, 1
    %v107 = vadd.f32 %v105, %v106
    %v108 = vadd.f32 %v96, %v107
    %vm109 = vcmask 122880
    %110 = vst.msk [vmem:[#allocation7] sm:$0x1] %vm109, %v108
    // Predicated region
    $region22: #{tpu_custom_call.1} parent=1 // pred_check
      _
    $region23: #{tpu_custom_call.1} parent=1 // pred_check_branch
      %112 = sbr.rel (0) target = $region25
    $region24: #{tpu_custom_call.1} parent=1 // pred_region
      %s114 = ssub.s32 16, 16
      %115 = vsyncadd [#allocation4], %s114
      %s117 = sshll.u32 [#allocation7], 4
      %s118 = int_to_ptr.vmem [resolvable:$true] %s117
      %120 = dma.vmem_to_hbm [thread:$0]  %s118, 16, %s2, [#allocation4]
    $region25: #{tpu_custom_call.1} parent=1 // pred_fallthru
      _
    // Predicated region
    $region26: #{tpu_custom_call.1} parent=1 // pred_check
      _
    $region27: #{tpu_custom_call.1} parent=1 // pred_check_branch
      %122 = sbr.rel (0) target = $region29
    $region28: #{tpu_custom_call.1} parent=1 // pred_region
      %123 = dma.done [#allocation4], 16
    $region29: #{tpu_custom_call.1} parent=1 // pred_fallthru
      _
    %124 = vsyncpa [#allocation3], 1
    %125 = vsyncpa [#allocation6], 1
    %126 = vsyncpa [#allocation4], 1

</llo_original>
